<compile_context>
chip_gen: v5e
topology: v5e:2x2
jax: 0.10.0
libtpu: 0.0.40
codegen_flags: <defaults>
</compile_context>

<pallas_src>
import numpy as np
import jax
import jax.numpy as jnp
from jax import lax
from jax.experimental import pallas as pl
from jax.experimental.pallas import tpu as pltpu

FORWARD_DIM = 200
_VMEM_LIMIT = 48 * 1024 * 1024   # stay under v7x's 64 MiB physical VMEM (v5e/v6e have 128 MiB)


def _cparams(sem):
    return pltpu.CompilerParams(dimension_semantics=sem,
                                vmem_limit_bytes=_VMEM_LIMIT)


def _row_tile(n, max_tile=256):
    # block second-to-last dim must be a multiple of 8 or equal the full dim
    return n if n <= max_tile else max_tile


# ------------------------------------------------------------------
# Hoisted input projection: gates_x = x @ W_ih + (b_ih + b_hh)
# (one large, pipelined MXU matmul over all T*B rows)
# ------------------------------------------------------------------
def _linear_kernel(x_ref, w_ref, b_ref, out_ref):
    out_ref[...] = (jnp.dot(x_ref[...], w_ref[...],
                            preferred_element_type=jnp.float32)
                    + b_ref[...]).astype(out_ref.dtype)


def input_proj_pallas(x, w, b):
    """x: (N, E) f32, w: (E, 4H), b: (1, 4H) -> (N, 4H) f32."""
    N, E = x.shape
    G = w.shape[1]
    tn = _row_tile(N)
    return pl.pallas_call(
        _linear_kernel,
        out_shape=jax.ShapeDtypeStruct((N, G), jnp.float32),
        grid_spec=pltpu.PrefetchScalarGridSpec(
            num_scalar_prefetch=0,
            grid=(pl.cdiv(N, tn),),
            in_specs=[
                pl.BlockSpec((tn, E), lambda i: (i, 0)),
                pl.BlockSpec((E, G), lambda i: (0, 0)),   # W_ih resident
                pl.BlockSpec((1, G), lambda i: (0, 0)),   # combined bias resident
            ],
            out_specs=pl.BlockSpec((tn, G), lambda i: (i, 0)),
        ),
        compiler_params=_cparams(("parallel",)),
    )(x, w, b)


# ------------------------------------------------------------------
# LSTM recurrence kernel: one grid step == Tc time steps (inner unrolled loop)
# ------------------------------------------------------------------
def _lstm_kernel(gx_ref, h0_ref, c0_ref, w_hh_ref,
                 out_ref, hN_ref, cN_ref, h_scr, c_scr):
    t = pl.program_id(0)

    @pl.when(t == 0)
    def _():
        h_scr[...] = h0_ref[...]
        c_scr[...] = c0_ref[...]

    w_hh = w_hh_ref[...]
    Tc = gx_ref.shape[0]
    H = h0_ref.shape[-1]

    def step(s, carry):
        h, c = carry
        # x @ W_ih + bias was precomputed; only the recurrent matmul is on the critical path
        gates = gx_ref[s] + jnp.dot(h, w_hh, preferred_element_type=jnp.float32)  # (B, 4H)
        sig = jax.nn.sigmoid(gates)   # one EUP pass over the full (B, 4H) vreg
        th = jnp.tanh(gates)          # one EUP pass over the full (B, 4H) vreg
        i_g = sig[:, 0 * H:1 * H]
        f_g = sig[:, 1 * H:2 * H]
        g_g = th[:, 2 * H:3 * H]
        o_g = sig[:, 3 * H:4 * H]
        c_new = f_g * c + i_g * g_g
        h_new = o_g * jnp.tanh(c_new)
        out_ref[s] = h_new.astype(out_ref.dtype)
        return h_new, c_new

    h, c = lax.fori_loop(0, Tc, step, (h_scr[...], c_scr[...]), unroll=True)
    h_scr[...] = h
    c_scr[...] = c

    # final states written only once, on the last grid step
    @pl.when(t == pl.num_programs(0) - 1)
    def _():
        hN_ref[...] = h.astype(hN_ref.dtype)
        cN_ref[...] = c.astype(cN_ref.dtype)


def lstm_pallas(gates_x, h0, c0, w_hh, time_chunk=8):
    """gates_x: (T, B, 4H) f32 (time-major, input projection already applied).
    Returns (out_tm (T,B,H), hN (B,H), cN (B,H))."""
    T, B, G = gates_x.shape
    H = h0.shape[-1]
    Tc = time_chunk if (T % time_chunk == 0) else T
    return pl.pallas_call(
        _lstm_kernel,
        out_shape=(
            jax.ShapeDtypeStruct((T, B, H), jnp.float32),
            jax.ShapeDtypeStruct((B, H), jnp.float32),
            jax.ShapeDtypeStruct((B, H), jnp.float32),
        ),
        grid_spec=pltpu.PrefetchScalarGridSpec(
            num_scalar_prefetch=0,
            grid=(T // Tc,),
            in_specs=[
                pl.BlockSpec((Tc, B, G), lambda t: (t, 0, 0)),   # precomputed gate inputs
                pl.BlockSpec((B, H), lambda t: (0, 0)),          # h0 (read once)
                pl.BlockSpec((B, H), lambda t: (0, 0)),          # c0 (read once)
                pl.BlockSpec((H, G), lambda t: (0, 0)),          # W_hh resident
            ],
            out_specs=[
                pl.BlockSpec((Tc, B, H), lambda t: (t, 0, 0)),   # per-chunk hidden states
                pl.BlockSpec((B, H), lambda t: (0, 0)),          # final h (last step only)
                pl.BlockSpec((B, H), lambda t: (0, 0)),          # final c (last step only)
            ],
            scratch_shapes=[
                pltpu.VMEM((B, H), jnp.float32),                 # h carry across chunks
                pltpu.VMEM((B, H), jnp.float32),                 # c carry across chunks
            ],
        ),
        compiler_params=_cparams(("arbitrary",)),                # time axis is sequential
    )(gates_x, h0, c0, w_hh)


# ------------------------------------------------------------------
# Final MLP kernel: Linear(H -> FORWARD_DIM) -> ReLU -> Linear(FORWARD_DIM -> V)
# tiled over (row tiles x vocab tiles)
# ------------------------------------------------------------------
def _mlp_kernel(x_ref, w1_ref, b1_ref, w2_ref, b2_ref, out_ref):
    h = jnp.dot(x_ref[...], w1_ref[...], preferred_element_type=jnp.float32) + b1_ref[...]
    h = jnp.maximum(h, 0.0)
    out_ref[...] = (jnp.dot(h, w2_ref[...], preferred_element_type=jnp.float32)
                    + b2_ref[...]).astype(out_ref.dtype)


def mlp_pallas(x, w1, b1, w2, b2):
    """x: (N, H) f32 -> (N, V) f32."""
    N, H = x.shape
    F = w1.shape[1]
    V = w2.shape[1]
    tn = _row_tile(N)
    tv = V if V <= 512 else 512
    return pl.pallas_call(
        _mlp_kernel,
        out_shape=jax.ShapeDtypeStruct((N, V), jnp.float32),
        grid_spec=pltpu.PrefetchScalarGridSpec(
            num_scalar_prefetch=0,
            grid=(pl.cdiv(N, tn), pl.cdiv(V, tv)),
            in_specs=[
                pl.BlockSpec((tn, H), lambda i, j: (i, 0)),
                pl.BlockSpec((H, F), lambda i, j: (0, 0)),       # w1 resident
                pl.BlockSpec((1, F), lambda i, j: (0, 0)),       # b1 resident
                pl.BlockSpec((F, tv), lambda i, j: (0, j)),      # w2 tiled along V
                pl.BlockSpec((1, tv), lambda i, j: (0, j)),      # b2 tiled along V
            ],
            out_specs=pl.BlockSpec((tn, tv), lambda i, j: (i, j)),
        ),
        compiler_params=_cparams(("parallel", "parallel")),      # megacore-shardable
    )(x, w1, b1, w2, b2)


# ------------------------------------------------------------------
# Model wrapper (glue: embedding gather, layout, reshapes)
# ------------------------------------------------------------------
def init_params(key, vocab_size, embed_dim, hidden):
    k = jax.random.split(key, 8)
    s_lstm = 1.0 / np.sqrt(hidden)
    s_l1 = 1.0 / np.sqrt(hidden)
    s_l2 = 1.0 / np.sqrt(FORWARD_DIM)
    return {
        "emb": jax.random.normal(k[0], (vocab_size, embed_dim), jnp.float32),
        # stored pre-transposed relative to PyTorch ([in, 4H] instead of [4H, in])
        "w_ih": jax.random.uniform(k[1], (embed_dim, 4 * hidden), jnp.float32, -s_lstm, s_lstm),
        "w_hh": jax.random.uniform(k[2], (hidden, 4 * hidden), jnp.float32, -s_lstm, s_lstm),
        "b": jax.random.uniform(k[3], (1, 4 * hidden), jnp.float32, -s_lstm, s_lstm),  # b_ih + b_hh
        "w1": jax.random.uniform(k[4], (hidden, FORWARD_DIM), jnp.float32, -s_l1, s_l1),
        "b1": jax.random.uniform(k[5], (1, FORWARD_DIM), jnp.float32, -s_l1, s_l1),
        "w2": jax.random.uniform(k[6], (FORWARD_DIM, vocab_size), jnp.float32, -s_l2, s_l2),
        "b2": jax.random.uniform(k[7], (1, vocab_size), jnp.float32, -s_l2, s_l2),
    }


def language_model_forward(tokens, params):
    """tokens: (B, T) int32 -> (logits (B,T,V), h (1,B,H), c (1,B,H))."""
    B, T = tokens.shape
    H = params["w_hh"].shape[0]
    V = params["w2"].shape[1]

    # TODO(synk): embedding lookup stays a single XLA gather (jnp.take); a Pallas version
    # would need a manual DMA gather.  Gather directly in time-major (t, b) row order so no
    # (B,T,E)->(T,B,E) activation transpose is materialized.
    tok_tm = jnp.transpose(tokens).reshape(-1)                    # (T*B,)
    emb_tm = jnp.take(params["emb"], tok_tm, axis=0)              # (T*B, E)

    # Hoisted input projection: one big MXU matmul; removes W_ih from the recurrence.
    gates_x = input_proj_pallas(emb_tm, params["w_ih"], params["b"])   # (T*B, 4H)
    gates_x = gates_x.reshape(T, B, 4 * H)

    h0 = jnp.zeros((B, H), jnp.float32)
    c0 = jnp.zeros((B, H), jnp.float32)
    out_tm, hN, cN = lstm_pallas(gates_x, h0, c0, params["w_hh"])      # (T,B,H)

    # Transpose the *small* (T,B,H) hidden tensor to batch-major so the large (B,T,V)
    # logits come out of the MLP already in the right layout (no post-transpose).
    x = jnp.transpose(out_tm, (1, 0, 2)).reshape(B * T, H)
    logits = mlp_pallas(x, params["w1"], params["b1"],
                        params["w2"], params["b2"]).reshape(B, T, V)

    return logits, hN[None], cN[None]                              # numLayers = 1


# ------------------------------------------------------------------
# Pure-JAX reference (for correctness check)
# ------------------------------------------------------------------
def reference_forward(tokens, params):
    emb = jnp.take(params["emb"], tokens, axis=0)           # (B, T, E)
    B, T, E = emb.shape
    H = params["w_hh"].shape[0]

    def step(carry, x_t):
        h, c = carry
        gates = x_t @ params["w_ih"] + h @ params["w_hh"] + params["b"][0]
        i_g = jax.nn.sigmoid(gates[:, 0 * H:1 * H])
        f_g = jax.nn.sigmoid(gates[:, 1 * H:2 * H])
        g_g = jnp.tanh(gates[:, 2 * H:3 * H])
        o_g = jax.nn.sigmoid(gates[:, 3 * H:4 * H])
        c_new = f_g * c + i_g * g_g
        h_new = o_g * jnp.tanh(c_new)
        return (h_new, c_new), h_new

    (hN, cN), out_tm = lax.scan(step,
                                (jnp.zeros((B, H)), jnp.zeros((B, H))),
                                jnp.transpose(emb, (1, 0, 2)))
    out = jnp.transpose(out_tm, (1, 0, 2))                  # (B, T, H)
    x = out.reshape(-1, H)
    h1 = jnp.maximum(x @ params["w1"] + params["b1"][0], 0.0)
    logits = (h1 @ params["w2"] + params["b2"][0]).reshape(B, T, -1)
    return logits, hN[None], cN[None]


if __name__ == "__main__":
    VOCAB, EMBED, HIDDEN = 128, 32, 32
    B, T = 2, 16          # T=16 with Tc=8 exercises the chunked recurrence (2 grid steps)

    key = jax.random.PRNGKey(0)
    pkey, tkey = jax.random.split(key)
    params = init_params(pkey, VOCAB, EMBED, HIDDEN)
    tokens = jax.random.randint(tkey, (B, T), 0, VOCAB, dtype=jnp.int32)

    logits, h, c = jax.block_until_ready(language_model_forward(tokens, params))
    ref_logits, ref_h, ref_c = reference_forward(tokens, params)

    np.testing.assert_allclose(np.asarray(logits), np.asarray(ref_logits), rtol=1e-5, atol=1e-5)
    np.testing.assert_allclose(np.asarray(h), np.asarray(ref_h), rtol=1e-5, atol=1e-5)
    np.testing.assert_allclose(np.asarray(c), np.asarray(ref_c), rtol=1e-5, atol=1e-5)

    assert logits.shape == (B, T, VOCAB) and h.shape == (1, B, HIDDEN) and c.shape == (1, B, HIDDEN)
    print("KERNEL_OK")
</pallas_src>

<mosaic_0001>
module attributes {stable_mosaic.version = 11 : i64} {
  func.func @_linear_kernel(%arg0: i32, %arg1: memref<32x32xf32, #tpu.memory_space<vmem>>, %arg2: memref<32x128xf32, #tpu.memory_space<vmem>>, %arg3: memref<1x128xf32, #tpu.memory_space<vmem>>, %arg4: memref<32x128xf32, #tpu.memory_space<vmem>>) attributes {dimension_semantics = [#tpu.dimension_semantics<parallel>], iteration_bounds = array<i64: 1>, scalar_prefetch = 0 : i64, scratch_operands = 0 : i64, tpu.core_type = #tpu.core_type<tc>, window_params = [{transform_indices = @transform_0, window_bounds = array<i64: 32, 32>}, {pipeline_mode = #tpu.pipeline_mode<synchronous>, transform_indices = @transform_1, window_bounds = array<i64: 32, 128>}, {pipeline_mode = #tpu.pipeline_mode<synchronous>, transform_indices = @transform_2, window_bounds = array<i64: 1, 128>}, {transform_indices = @transform_3, window_bounds = array<i64: 32, 128>}]} {
    %c0 = arith.constant 0 : index
    %c0_0 = arith.constant 0 : index
    %0 = vector.load %arg1[%c0, %c0_0] : memref<32x32xf32, #tpu.memory_space<vmem>>, vector<32x32xf32>
    %c0_1 = arith.constant 0 : index
    %c0_2 = arith.constant 0 : index
    %1 = vector.load %arg2[%c0_1, %c0_2] : memref<32x128xf32, #tpu.memory_space<vmem>>, vector<32x128xf32>
    %cst = arith.constant dense<0.000000e+00> : vector<32x128xf32>
    %2 = tpu.matmul %0, %1, %cst {dimension_numbers = #tpu.dot_dimension_numbers<[1], [0], [0], [1], [0, 0, 1, 1], [], []>} : vector<32x32xf32>, vector<32x128xf32>, vector<32x128xf32> -> vector<32x128xf32>
    %c0_3 = arith.constant 0 : index
    %c0_4 = arith.constant 0 : index
    %3 = vector.load %arg3[%c0_3, %c0_4] : memref<1x128xf32, #tpu.memory_space<vmem>>, vector<1x128xf32>
    %4 = vector.broadcast %3 : vector<1x128xf32> to vector<32x128xf32>
    %5 = arith.addf %2, %4 : vector<32x128xf32>
    %c0_5 = arith.constant 0 : index
    %c0_6 = arith.constant 0 : index
    %6 = vector.load %arg4[%c0_5, %c0_6] : memref<32x128xf32, #tpu.memory_space<vmem>>, vector<32x128xf32>
    tpu.vector_store %arg4[%c0_5, %c0_6], %5 {strides = array<i32>} : memref<32x128xf32, #tpu.memory_space<vmem>>, vector<32x128xf32>,
    return
  }
  func.func @transform_0(%arg0: i32) -> (i32, i32) {
    %c0_i32 = arith.constant 0 : i32
    %c0_i32_0 = arith.constant 0 : i32
    return %arg0, %c0_i32 : i32, i32
  }
  func.func @transform_1(%arg0: i32) -> (i32, i32) {
    %c0_i32 = arith.constant 0 : i32
    %c0_i32_0 = arith.constant 0 : i32
    %c0_i32_1 = arith.constant 0 : i32
    return %c0_i32, %c0_i32_0 : i32, i32
  }
  func.func @transform_2(%arg0: i32) -> (i32, i32) {
    %c0_i32 = arith.constant 0 : i32
    %c0_i32_0 = arith.constant 0 : i32
    %c0_i32_1 = arith.constant 0 : i32
    return %c0_i32, %c0_i32_0 : i32, i32
  }
  func.func @transform_3(%arg0: i32) -> (i32, i32) {
    %c0_i32 = arith.constant 0 : i32
    %c0_i32_0 = arith.constant 0 : i32
    return %arg0, %c0_i32 : i32, i32
  }
}

</mosaic_0001>

<llo_original>
// kernel: tpu_custom_call.1
$region0: #{tpu_custom_call.1}
  #allocation0 [shape = 'u32[]', space=smem, size = 0x4, offset = 0x4, fixed_abs, tag = 'smem constant byte address 0x4 - core index']
  #allocation1 [shape = 'u32[72,128]{1,0:T(1,128)}', space=vmem, size = 0x9000, scoped, tag = 'internal scratch']
  %s0 = inlined_call_operand.hbm [shape: f32[32,32], index: 0, kind: input, shape index: {}]
  %s1 = inlined_call_operand.hbm [shape: f32[32,128], index: 1, kind: input, shape index: {}]
  %s2 = inlined_call_operand.vmem [shape: f32[1,128], index: 2, kind: input, shape index: {}]
  %s3 = inlined_call_operand.hbm [shape: f32[32,128], index: 3, kind: output, shape index: {}]
  %s4 = sld [smem:[#allocation0]]
  $region30: #{tpu_custom_call.1} parent=0
    _
  %s6 = ssub.s32 1, %s4
  %s7 = scalar_select 0, %s6, %s4
  $region1: #{tpu_custom_call.1} parent=0
    #allocation2 [shape = 'u8[16384]{0}', space=vmem, size = 0x4000, scoped, tag = 'input window, operand 0, single buffered']
    #allocation3 [shape = 's32[1]{0}', space=sflag, size = 0x4, scoped, tag = 'scoped memory for tpu_custom_call.1']
    #allocation4 [shape = 's32[1]{0}', space=sflag, size = 0x4, scoped, tag = 'scoped memory for tpu_custom_call.1']
    #allocation5 [shape = 'u8[16384]{0}', space=vmem, size = 0x4000, scoped, tag = 'input window, operand 1, single buffered']
    #allocation6 [shape = 's32[1]{0}', space=sflag, size = 0x4, scoped, tag = 'scoped memory for tpu_custom_call.1']
    #allocation7 [shape = 'u8[16384]{0}', space=vmem, size = 0x4000, scoped, tag = 'output window, operand 0, single buffered']
    %8 = vsyncpa [#allocation3], 0
    %9 = vsyncpa [#allocation6], 0
    %10 = vsyncpa [#allocation4], 0
    // Predicated region
    $region2: #{tpu_custom_call.1} parent=1 // pred_check
      _
    $region3: #{tpu_custom_call.1} parent=1 // pred_check_branch
      %12 = sbr.rel (0) target = $region5
    $region4: #{tpu_custom_call.1} parent=1 // pred_region
      %14 = vsyncadd [#allocation3], 0
      %s15 = sshll.u32 %s0, 4
      %s16 = int_to_ptr.hbm [resolvable:$true] %s15
      %s17 = sshll.u32 [#allocation2], 4
      %s18 = int_to_ptr.vmem [resolvable:$true] %s17
      %23 = dma.hbm_to_vmem [thread:$0]  %s16, 512, %s18, [#allocation3], 128, 128, 8
    $region5: #{tpu_custom_call.1} parent=1 // pred_fallthru
      _
    // Predicated region
    $region6: #{tpu_custom_call.1} parent=1 // pred_check
      _
    $region7: #{tpu_custom_call.1} parent=1 // pred_check_branch
      %25 = sbr.rel (0) target = $region9
    $region8: #{tpu_custom_call.1} parent=1 // pred_region
      %27 = vsyncadd [#allocation6], 0
      %s28 = sshll.u32 %s1, 4
      %s29 = int_to_ptr.hbm [resolvable:$true] %s28
      %s30 = sshll.u32 [#allocation5], 4
      %s31 = int_to_ptr.vmem [resolvable:$true] %s30
      %36 = dma.hbm_to_vmem [thread:$0]  %s29, 512, %s31, [#allocation6], 128, 128, 8
    $region9: #{tpu_custom_call.1} parent=1 // pred_fallthru
      _
    // Predicated region
    $region10: #{tpu_custom_call.1} parent=1 // pred_check
      _
    $region11: #{tpu_custom_call.1} parent=1 // pred_check_branch
      %38 = sbr.rel (0) target = $region13
    $region12: #{tpu_custom_call.1} parent=1 // pred_region
      _
    $region13: #{tpu_custom_call.1} parent=1 // pred_fallthru
      _
    // Predicated region
    $region14: #{tpu_custom_call.1} parent=1 // pred_check
      _
    $region15: #{tpu_custom_call.1} parent=1 // pred_check_branch
      %40 = sbr.rel (0) target = $region17
    $region16: #{tpu_custom_call.1} parent=1 // pred_region
      %42 = dma.done [#allocation3], 512
    $region17: #{tpu_custom_call.1} parent=1 // pred_fallthru
      _
    // Predicated region
    $region18: #{tpu_custom_call.1} parent=1 // pred_check
      _
    $region19: #{tpu_custom_call.1} parent=1 // pred_check_branch
      %44 = sbr.rel (0) target = $region21
    $region20: #{tpu_custom_call.1} parent=1 // pred_region
      %46 = dma.done [#allocation6], 512
    $region21: #{tpu_custom_call.1} parent=1 // pred_fallthru
      _
    %v47 = vld [vmem:[#allocation2] sm:$0xff]
    %v48 = vld [vmem:[#allocation2 + $0x8] sm:$0xff]
    %v49 = vld [vmem:[#allocation2 + $0x10] sm:$0xff]
    %v50 = vld [vmem:[#allocation2 + $0x18] sm:$0xff]
    %v51 = vld [vmem:[#allocation5] sm:$0xff]
    %v52 = vld [vmem:[#allocation5 + $0x8] sm:$0xff]
    %v53 = vld [vmem:[#allocation5 + $0x10] sm:$0xff]
    %v54 = vld [vmem:[#allocation5 + $0x18] sm:$0xff]
    %v55 = vld [vmem:[%s2] sm:$0x1]
    %v57 = vperm.slane %v55, 0
    %vm59 = vcmask 261120
    %v61 = vsel %vm59, %v47, 0
    %v64 = vsel %vm59, %v48, 0
    %v67 = vsel %vm59, %v49, 0
    %v70 = vsel %vm59, %v50, 0
    %72 = vmatpush.msra.mxu0 0.0
    %73 = vmatpush.msra.mxu0 0.0
    %74 = vmatpush.msra.mxu0 0.0
    %75 = vmatpush.msra.mxu0 0.0
    %76 = vmatpush.msra.mxu0 0.0
    %77 = vmatpush.msra.mxu0 0.0
    %78 = vmatpush.msra.mxu0 0.0
    %79 = vmatpush.msra.mxu0 0.0
    %80 = vmatpush.msra.mxu0 0.0
    %81 = vmatpush.msra.mxu0 0.0
    %82 = vmatpush.msra.mxu0 0.0
    %83 = vmatpush.msra.mxu0 0.0
    %84 = vmatpush.msra.mxu0 %v54
    %85 = vmatpush.msra.mxu0 %v53
    %86 = vmatpush.msra.mxu0 %v52
    %87 = vmatpush.msra.mxu0 %v51
    %88 = vmatmul.f32.gmra.mxu0 %v61
    %v89 = vpop.f32.mrf.mxu0
    %v90 = vadd.f32 %v57, %v89
    %91 = vmatmul.f32.gmra.mxu0 %v64
    %v92 = vpop.f32.mrf.mxu0
    %v93 = vadd.f32 %v57, %v92
    %94 = vmatmul.f32.gmra.mxu0 %v67
    %v95 = vpop.f32.mrf.mxu0
    %v96 = vadd.f32 %v57, %v95
    %97 = vmatmul.f32.gmra.mxu0 %v70
    %v98 = vpop.f32.mrf.mxu0
    %v99 = vadd.f32 %v57, %v98
    %100 = vdwg.mxu0
    %101 = vst [vmem:[#allocation7] sm:$0xff] %v90
    %102 = vst [vmem:[#allocation7 + $0x8] sm:$0xff] %v93
    %103 = vst [vmem:[#allocation7 + $0x10] sm:$0xff] %v96
    %104 = vst [vmem:[#allocation7 + $0x18] sm:$0xff] %v99
    // Predicated region
    $region22: #{tpu_custom_call.1} parent=1 // pred_check
      _
    $region23: #{tpu_custom_call.1} parent=1 // pred_check_branch
      %106 = sbr.rel (0) target = $region25
    $region24: #{tpu_custom_call.1} parent=1 // pred_region
      %108 = vsyncadd [#allocation4], 0
      %s109 = sshll.u32 [#allocation7], 4
      %s110 = int_to_ptr.vmem [resolvable:$true] %s109
      %s111 = sshll.u32 %s3, 4
      %s112 = int_to_ptr.hbm [resolvable:$true] %s111
      %117 = dma.vmem_to_hbm [thread:$0]  %s110, 512, %s112, [#allocation4], 128, 128, 8
    $region25: #{tpu_custom_call.1} parent=1 // pred_fallthru
      _
    // Predicated region
    $region26: #{tpu_custom_call.1} parent=1 // pred_check
      _
    $region27: #{tpu_custom_call.1} parent=1 // pred_check_branch
      %119 = sbr.rel (0) target = $region29
    $region28: #{tpu_custom_call.1} parent=1 // pred_region
      %121 = dma.done [#allocation4], 512
    $region29: #{tpu_custom_call.1} parent=1 // pred_fallthru
      _
    %122 = vsyncpa [#allocation3], 1
    %123 = vsyncpa [#allocation6], 1
    %124 = vsyncpa [#allocation4], 1

</llo_original>
